<compile_context>
chip_gen: v7x
topology: tpu7x:2x2x1
jax: 0.10.0
libtpu: 0.0.40
codegen_flags: <defaults>
</compile_context>

<pallas_src>
import functools
import math

import jax
import jax.numpy as jnp
from jax import lax
from jax.experimental import pallas as pl
from jax.experimental.pallas import tpu as pltpu

_LANES = 128     # lane width (last-dim tiling unit)
_ROW_UNIT = 16   # bf16 sublane packing -> keep row tiles a multiple of 16


def _round_up(x, m):
    return (x + m - 1) // m * m


def _supcon_kernel(inv_temp, eps_shift, sum_adjust,
                   xr_hi_ref, xr_lo_ref, xc_hi_ref, xc_lo_ref,
                   lab_r_ref, lab_c_ref,
                   num_ref, cnt_ref,
                   row_sum, pos_acc, cnt_acc):
    i = pl.program_id(0)          # row tile (parallel)
    j = pl.program_id(1)          # col tile (reduction axis, innermost)
    tm = xr_hi_ref.shape[0]
    tn = xc_hi_ref.shape[1]

    @pl.when(j == 0)
    def _init():
        row_sum[...] = jnp.zeros_like(row_sum)
        pos_acc[...] = jnp.zeros_like(pos_acc)
        cnt_acc[...] = jnp.zeros_like(cnt_acc)

    # bf16x3 cosine-similarity tile on the MXU (f32 accumulation, no transpose:
    # column operands are pre-transposed to (D, tn) in the wrapper).
    dims = (((1,), (0,)), ((), ()))
    xr_hi = xr_hi_ref[...]
    xr_lo = xr_lo_ref[...]
    xc_hi = xc_hi_ref[...]
    xc_lo = xc_lo_ref[...]
    cos = lax.dot_general(xr_hi, xc_hi, dims, preferred_element_type=jnp.float32)
    cos = cos + lax.dot_general(xr_hi, xc_lo, dims, preferred_element_type=jnp.float32)
    cos = cos + lax.dot_general(xr_lo, xc_hi, dims, preferred_element_type=jnp.float32)

    lab_r = lab_r_ref[...]                                             # (tm, 1) i32
    row_ids = i * tm + lax.broadcasted_iota(jnp.int32, (tm, 1), 0)     # (tm, 1)

    # Elementwise bookkeeping in 128-lane chunks; accumulators stay lane-wise
    # (VPU adds only) until the finalize.
    for ci in range(tn // _LANES):
        lo_col = ci * _LANES
        cos_c = cos[:, lo_col:lo_col + _LANES]                         # (tm, 128)
        lab_c = lab_c_ref[:, lo_col:lo_col + _LANES]                   # (1, 128)
        col_ids = (j * tn + lo_col
                   + lax.broadcasted_iota(jnp.int32, (1, _LANES), 1))  # (1, 128)
        # Padded rows/cols carry sentinel labels (-1 / -2), so no validity mask
        # is needed here (real labels are assumed >= 0).
        pos = (lab_r == lab_c) & (row_ids != col_ids)                  # (tm, 128)

        # exp(sim/T) shifted by the exact per-row max 1/T (diagonal cosine == 1),
        # so exp never overflows even for tiny temperatures.
        e = jnp.exp(cos_c * inv_temp - inv_temp)
        # Exact PyTorch positive term: log(exp(sim) + 1e-6) = 1/T + log(e + eps_shift);
        # the 1/T cancels against the same shift in the denominator at finalize.
        pos_log = jnp.where(pos, jnp.log(e + eps_shift), 0.0)

        row_sum[...] += e
        pos_acc[...] += pos_log
        cnt_acc[...] += pos.astype(jnp.float32)

    @pl.when(j == pl.num_programs(1) - 1)
    def _finalize():
        # Single cross-lane reduction per row tile. sum_adjust folds the reference's
        # +1e-6 (rescaled by the exp shift) and removes the known constant
        # contribution of the zero-feature padded columns.
        rs = jnp.sum(row_sum[...], axis=1, keepdims=True)              # (tm, 1)
        denom = jnp.log(rs + sum_adjust)                               # (tm, 1)
        ps = jnp.sum(pos_acc[...], axis=1, keepdims=True)              # (tm, 1)
        cnt = jnp.sum(cnt_acc[...], axis=1, keepdims=True)             # (tm, 1)
        num = jnp.sum(ps - cnt * denom)     # partial loss numerator (sign applied later)
        tot = jnp.sum(cnt)                  # partial positive count
        num_ref[...] = jnp.broadcast_to(num, num_ref.shape)
        cnt_ref[...] = jnp.broadcast_to(tot, cnt_ref.shape)


def supcon_loss(features, labels, temperature=0.1, block_m=256, block_n=256,
                vmem_limit_bytes=40 * 1024 * 1024):
    """features: [B, D] float, labels: [B] int (>= 0) -> scalar float32 SupCon loss."""
    B, D = features.shape
    inv_temp = 1.0 / float(temperature)

    # Decoupled, batch-clamped tiles: rows in multiples of 16 (bf16 sublanes),
    # cols in multiples of 128 (lanes).
    block_m = max(_ROW_UNIT, min(_round_up(block_m, _ROW_UNIT), _round_up(B, _ROW_UNIT)))
    block_n = max(_LANES, min(_round_up(block_n, _LANES), _round_up(B, _LANES)))
    B_pad_r = _round_up(B, block_m)
    B_pad_c = _round_up(B, block_n)
    D_pad = _round_up(D, _LANES)
    n_rt = B_pad_r // block_m
    n_ct = B_pad_c // block_n

    # One-shot prep hoisted out of the kernel: F.normalize(dim=1), bf16 hi/lo split,
    # independent row/col padding, pre-transposed column operands.
    x = features.astype(jnp.float32)
    norm = jnp.sqrt(jnp.sum(x * x, axis=1, keepdims=True))
    x = x / jnp.maximum(norm, 1e-12)
    x_hi = x.astype(jnp.bfloat16)
    x_lo = (x - x_hi.astype(jnp.float32)).astype(jnp.bfloat16)

    def pad_rows(a):
        return jnp.zeros((B_pad_r, D_pad), jnp.bfloat16).at[:B, :D].set(a)

    def pad_cols_t(a):
        return jnp.zeros((D_pad, B_pad_c), jnp.bfloat16).at[:D, :B].set(a.T)

    xr_hi, xr_lo = pad_rows(x_hi), pad_rows(x_lo)
    xc_hi, xc_lo = pad_cols_t(x_hi), pad_cols_t(x_lo)

    labels_i32 = labels.astype(jnp.int32)
    lab_r = jnp.full((B_pad_r, 1), -1, jnp.int32).at[:B, 0].set(labels_i32)
    lab_c = jnp.full((1, B_pad_c), -2, jnp.int32).at[0, :B].set(labels_i32)

    # Each zero-feature padded column contributes exactly exp((0-1)/T) to every row's
    # exp-sum; fold that constant and the reference's +1e-6 (rescaled by the exp shift)
    # into one finalize constant.
    eps_shift = 1e-6 * math.exp(-inv_temp)
    sum_adjust = eps_shift - (B_pad_c - B) * math.exp(-inv_temp)

    kernel = functools.partial(_supcon_kernel, inv_temp, eps_shift, sum_adjust)

    grid_spec = pltpu.PrefetchScalarGridSpec(
        num_scalar_prefetch=0,
        grid=(n_rt, n_ct),
        in_specs=[
            pl.BlockSpec((block_m, D_pad), lambda i, j: (i, 0)),   # row features hi
            pl.BlockSpec((block_m, D_pad), lambda i, j: (i, 0)),   # row features lo
            pl.BlockSpec((D_pad, block_n), lambda i, j: (0, j)),   # col features hi (pre-T)
            pl.BlockSpec((D_pad, block_n), lambda i, j: (0, j)),   # col features lo (pre-T)
            pl.BlockSpec((block_m, 1),     lambda i, j: (i, 0)),   # row labels
            pl.BlockSpec((1, block_n),     lambda i, j: (0, j)),   # col labels
        ],
        out_specs=[
            pl.BlockSpec((8, _LANES), lambda i, j: (i, 0)),        # partial numerator
            pl.BlockSpec((8, _LANES), lambda i, j: (i, 0)),        # partial #positives
        ],
        scratch_shapes=[pltpu.VMEM((block_m, _LANES), jnp.float32)] * 3,
    )

    cost = pl.CostEstimate(
        flops=2 * 3 * B_pad_r * B_pad_c * D_pad,
        transcendentals=2 * B_pad_r * B_pad_c,
        bytes_accessed=(4 * B_pad_r * D_pad                # row hi+lo (bf16) once
                        + 4 * n_rt * B_pad_c * D_pad       # col hi+lo re-streamed per row tile
                        + 4 * (B_pad_r + B_pad_c)
                        + 2 * n_rt * 8 * _LANES * 4),
    )

    num_p, cnt_p = pl.pallas_call(
        kernel,
        out_shape=(jax.ShapeDtypeStruct((n_rt * 8, _LANES), jnp.float32),
                   jax.ShapeDtypeStruct((n_rt * 8, _LANES), jnp.float32)),
        grid_spec=grid_spec,
        compiler_params=pltpu.CompilerParams(
            dimension_semantics=("parallel", "arbitrary"),   # row tiles across TCs
            vmem_limit_bytes=vmem_limit_bytes,               # < 64 MiB physical on v7x
        ),
        cost_estimate=cost,
    )(xr_hi, xr_lo, xc_hi, xc_lo, lab_r, lab_c)

    total_num = jnp.sum(num_p.reshape(n_rt, 8, _LANES)[:, 0, 0])
    total_cnt = jnp.sum(cnt_p.reshape(n_rt, 8, _LANES)[:, 0, 0])
    # NaN when no positive pairs exist -- identical failure mode to the PyTorch module.
    return -total_num / total_cnt


def _supcon_loss_ref(features, labels, temperature=0.1):
    """Pure-JAX f32 mirror of the PyTorch SupConLoss forward."""
    x = features.astype(jnp.float32)
    nrm = jnp.sqrt(jnp.sum(x * x, axis=1, keepdims=True))
    x = x / jnp.maximum(nrm, 1e-12)
    sim = (x @ x.T) / temperature
    bsz = features.shape[0]
    pos = (labels[None, :] == labels[:, None]) & ~jnp.eye(bsz, dtype=bool)
    pos_f = pos.astype(jnp.float32)
    exp_sim = jnp.exp(sim)
    log_prob = (jnp.log(exp_sim * pos_f + 1e-6)
                - jnp.log(jnp.sum(exp_sim, axis=1, keepdims=True) + 1e-6))
    return -jnp.sum(log_prob * pos_f) / jnp.sum(pos_f)


if __name__ == "__main__":
    key = jax.random.PRNGKey(0)
    k1, k2, k3 = jax.random.split(key, 3)

    # Case 1: small batch (typical module usage) -> single-tile grid.
    B, D = 8, 32
    feats = jax.random.normal(k1, (B, D), dtype=jnp.float32)
    labels = jnp.array([0, 1, 2, 3, 0, 1, 2, 3], dtype=jnp.int32)
    loss = jax.block_until_ready(supcon_loss(feats, labels, temperature=0.1))
    ref = _supcon_loss_ref(feats, labels, 0.1)
    assert bool(jnp.isfinite(loss)), loss
    assert jnp.allclose(loss, ref, rtol=3e-3, atol=3e-3), (loss, ref)

    # Case 2: unaligned batch/dim -> multi-tile grid, diagonal-straddling tiles,
    # padded rows/cols and the padded-column exp correction.
    B2, D2 = 300, 96
    f2 = jax.random.normal(k2, (B2, D2), dtype=jnp.float32)
    l2 = jax.random.randint(k3, (B2,), 0, 5, dtype=jnp.int32)
    loss2 = jax.block_until_ready(supcon_loss(f2, l2, temperature=0.1))
    ref2 = _supcon_loss_ref(f2, l2, 0.1)
    assert jnp.allclose(loss2, ref2, rtol=3e-3, atol=3e-3), (loss2, ref2)

    print("KERNEL_OK")
</pallas_src>

<mosaic_0001>
module attributes {stable_mosaic.version = 11 : i64} {
  func.func @_supcon_kernel(%arg0: i32, %arg1: i32, %arg2: memref<16x128xbf16, #tpu.memory_space<vmem>>, %arg3: memref<16x128xbf16, #tpu.memory_space<vmem>>, %arg4: memref<128x128xbf16, #tpu.memory_space<vmem>>, %arg5: memref<128x128xbf16, #tpu.memory_space<vmem>>, %arg6: memref<16x1xi32, #tpu.memory_space<vmem>>, %arg7: memref<1x128xi32, #tpu.memory_space<vmem>>, %arg8: memref<8x128xf32, #tpu.memory_space<vmem>>, %arg9: memref<8x128xf32, #tpu.memory_space<vmem>>, %arg10: memref<16x128xf32, #tpu.memory_space<vmem>>, %arg11: memref<16x128xf32, #tpu.memory_space<vmem>>, %arg12: memref<16x128xf32, #tpu.memory_space<vmem>>) attributes {dimension_semantics = [#tpu.dimension_semantics<parallel>, #tpu.dimension_semantics<arbitrary>], iteration_bounds = array<i64: 1, 1>, scalar_prefetch = 0 : i64, scratch_operands = 3 : i64, tpu.core_type = #tpu.core_type<tc>, window_params = [{transform_indices = @transform_0, window_bounds = array<i64: 16, 128>}, {transform_indices = @transform_1, window_bounds = array<i64: 16, 128>}, {transform_indices = @transform_2, window_bounds = array<i64: 128, 128>}, {transform_indices = @transform_3, window_bounds = array<i64: 128, 128>}, {transform_indices = @transform_4, window_bounds = array<i64: 16, 1>}, {transform_indices = @transform_5, window_bounds = array<i64: 1, 128>}, {transform_indices = @transform_6, window_bounds = array<i64: 8, 128>}, {transform_indices = @transform_7, window_bounds = array<i64: 8, 128>}]} {
    %c0_i32 = arith.constant 0 : i32
    %0 = arith.cmpi eq, %arg1, %c0_i32 : i32
    %1 = arith.extui %0 : i1 to i32
    %c0_i32_0 = arith.constant 0 : i32
    %2 = arith.cmpi ne, %1, %c0_i32_0 : i32
    scf.if %2 {
      %cst_33 = arith.constant 0.000000e+00 : f32
      %54 = vector.broadcast %cst_33 : f32 to vector<16x128xf32>
      %c0_34 = arith.constant 0 : index
      %c0_35 = arith.constant 0 : index
      %55 = vector.load %arg10[%c0_34, %c0_35] : memref<16x128xf32, #tpu.memory_space<vmem>>, vector<16x128xf32>
      tpu.vector_store %arg10[%c0_34, %c0_35], %54 {strides = array<i32>} : memref<16x128xf32, #tpu.memory_space<vmem>>, vector<16x128xf32>,
      %cst_36 = arith.constant 0.000000e+00 : f32
      %56 = vector.broadcast %cst_36 : f32 to vector<16x128xf32>
      %c0_37 = arith.constant 0 : index
      %c0_38 = arith.constant 0 : index
      %57 = vector.load %arg11[%c0_37, %c0_38] : memref<16x128xf32, #tpu.memory_space<vmem>>, vector<16x128xf32>
      tpu.vector_store %arg11[%c0_37, %c0_38], %56 {strides = array<i32>} : memref<16x128xf32, #tpu.memory_space<vmem>>, vector<16x128xf32>,
      %cst_39 = arith.constant 0.000000e+00 : f32
      %58 = vector.broadcast %cst_39 : f32 to vector<16x128xf32>
      %c0_40 = arith.constant 0 : index
      %c0_41 = arith.constant 0 : index
      %59 = vector.load %arg12[%c0_40, %c0_41] : memref<16x128xf32, #tpu.memory_space<vmem>>, vector<16x128xf32>
      tpu.vector_store %arg12[%c0_40, %c0_41], %58 {strides = array<i32>} : memref<16x128xf32, #tpu.memory_space<vmem>>, vector<16x128xf32>,
    } else {
    }
    %c0 = arith.constant 0 : index
    %c0_1 = arith.constant 0 : index
    %3 = vector.load %arg2[%c0, %c0_1] : memref<16x128xbf16, #tpu.memory_space<vmem>>, vector<16x128xbf16>
    %c0_2 = arith.constant 0 : index
    %c0_3 = arith.constant 0 : index
    %4 = vector.load %arg3[%c0_2, %c0_3] : memref<16x128xbf16, #tpu.memory_space<vmem>>, vector<16x128xbf16>
    %c0_4 = arith.constant 0 : index
    %c0_5 = arith.constant 0 : index
    %5 = vector.load %arg4[%c0_4, %c0_5] : memref<128x128xbf16, #tpu.memory_space<vmem>>, vector<128x128xbf16>
    %c0_6 = arith.constant 0 : index
    %c0_7 = arith.constant 0 : index
    %6 = vector.load %arg5[%c0_6, %c0_7] : memref<128x128xbf16, #tpu.memory_space<vmem>>, vector<128x128xbf16>
    %cst = arith.constant dense<0.000000e+00> : vector<16x128xf32>
    %7 = tpu.matmul %3, %5, %cst {dimension_numbers = #tpu.dot_dimension_numbers<[1], [0], [0], [1], [0, 0, 1, 1], [], []>} : vector<16x128xbf16>, vector<128x128xbf16>, vector<16x128xf32> -> vector<16x128xf32>
    %cst_8 = arith.constant dense<0.000000e+00> : vector<16x128xf32>
    %8 = tpu.matmul %3, %6, %cst_8 {dimension_numbers = #tpu.dot_dimension_numbers<[1], [0], [0], [1], [0, 0, 1, 1], [], []>} : vector<16x128xbf16>, vector<128x128xbf16>, vector<16x128xf32> -> vector<16x128xf32>
    %9 = arith.addf %7, %8 : vector<16x128xf32>
    %cst_9 = arith.constant dense<0.000000e+00> : vector<16x128xf32>
    %10 = tpu.matmul %4, %5, %cst_9 {dimension_numbers = #tpu.dot_dimension_numbers<[1], [0], [0], [1], [0, 0, 1, 1], [], []>} : vector<16x128xbf16>, vector<128x128xbf16>, vector<16x128xf32> -> vector<16x128xf32>
    %11 = arith.addf %9, %10 : vector<16x128xf32>
    %c0_10 = arith.constant 0 : index
    %c0_11 = arith.constant 0 : index
    %12 = vector.load %arg6[%c0_10, %c0_11] : memref<16x1xi32, #tpu.memory_space<vmem>>, vector<16x1xi32>
    %c16_i32 = arith.constant 16 : i32
    %13 = arith.muli %arg0, %c16_i32 : i32
    %14 = tpu.iota {dimensions = array<i32: 0>} : vector<16x1xi32>
    %15 = vector.broadcast %13 : i32 to vector<16x1xi32>
    %16 = arith.addi %15, %14 : vector<16x1xi32>
    %c0_12 = arith.constant 0 : index
    %c0_13 = arith.constant 0 : index
    %17 = vector.load %arg7[%c0_12, %c0_13] : memref<1x128xi32, #tpu.memory_space<vmem>>, vector<1x128xi32>
    %c128_i32 = arith.constant 128 : i32
    %18 = arith.muli %arg1, %c128_i32 : i32
    %c0_i32_14 = arith.constant 0 : i32
    %19 = arith.addi %18, %c0_i32_14 : i32
    %20 = tpu.iota {dimensions = array<i32: 1>} : vector<1x128xi32>
    %21 = vector.broadcast %19 : i32 to vector<1x128xi32>
    %22 = arith.addi %21, %20 : vector<1x128xi32>
    %23 = vector.broadcast %12 : vector<16x1xi32> to vector<16x128xi32>
    %24 = vector.broadcast %17 : vector<1x128xi32> to vector<16x128xi32>
    %25 = arith.cmpi eq, %23, %24 : vector<16x128xi32>
    %26 = vector.broadcast %16 : vector<16x1xi32> to vector<16x128xi32>
    %27 = vector.broadcast %22 : vector<1x128xi32> to vector<16x128xi32>
    %28 = arith.cmpi ne, %26, %27 : vector<16x128xi32>
    %29 = arith.andi %25, %28 : vector<16x128xi1>
    %cst_15 = arith.constant 1.000000e+01 : f32
    %30 = vector.broadcast %cst_15 : f32 to vector<16x128xf32>
    %31 = arith.mulf %11, %30 : vector<16x128xf32>
    %cst_16 = arith.constant 1.000000e+01 : f32
    %32 = vector.broadcast %cst_16 : f32 to vector<16x128xf32>
    %33 = arith.subf %31, %32 : vector<16x128xf32>
    %34 = math.exp %33 : vector<16x128xf32>
    %cst_17 = arith.constant 4.53999303E-11 : f32
    %35 = vector.broadcast %cst_17 : f32 to vector<16x128xf32>
    %36 = arith.addf %34, %35 : vector<16x128xf32>
    %37 = math.log %36 : vector<16x128xf32>
    %cst_18 = arith.constant 0.000000e+00 : f32
    %38 = vector.broadcast %cst_18 : f32 to vector<16x128xf32>
    %39 = arith.select %29, %37, %38 : vector<16x128xi1>, vector<16x128xf32>
    %c0_19 = arith.constant 0 : index
    %c0_20 = arith.constant 0 : index
    %40 = vector.load %arg10[%c0_19, %c0_20] : memref<16x128xf32, #tpu.memory_space<vmem>>, vector<16x128xf32>
    %41 = arith.addf %40, %34 : vector<16x128xf32>
    %c0_21 = arith.constant 0 : index
    %c0_22 = arith.constant 0 : index
    %42 = vector.load %arg10[%c0_21, %c0_22] : memref<16x128xf32, #tpu.memory_space<vmem>>, vector<16x128xf32>
    tpu.vector_store %arg10[%c0_21, %c0_22], %41 {strides = array<i32>} : memref<16x128xf32, #tpu.memory_space<vmem>>, vector<16x128xf32>,
    %c0_23 = arith.constant 0 : index
    %c0_24 = arith.constant 0 : index
    %43 = vector.load %arg11[%c0_23, %c0_24] : memref<16x128xf32, #tpu.memory_space<vmem>>, vector<16x128xf32>
    %44 = arith.addf %43, %39 : vector<16x128xf32>
    %c0_25 = arith.constant 0 : index
    %c0_26 = arith.constant 0 : index
    %45 = vector.load %arg11[%c0_25, %c0_26] : memref<16x128xf32, #tpu.memory_space<vmem>>, vector<16x128xf32>
    tpu.vector_store %arg11[%c0_25, %c0_26], %44 {strides = array<i32>} : memref<16x128xf32, #tpu.memory_space<vmem>>, vector<16x128xf32>,
    %c0_27 = arith.constant 0 : index
    %c0_28 = arith.constant 0 : index
    %46 = vector.load %arg12[%c0_27, %c0_28] : memref<16x128xf32, #tpu.memory_space<vmem>>, vector<16x128xf32>
    %47 = arith.extui %29 : vector<16x128xi1> to vector<16x128xi32>
    %48 = arith.sitofp %47 : vector<16x128xi32> to vector<16x128xf32>
    %49 = arith.addf %46, %48 : vector<16x128xf32>
    %c0_29 = arith.constant 0 : index
    %c0_30 = arith.constant 0 : index
    %50 = vector.load %arg12[%c0_29, %c0_30] : memref<16x128xf32, #tpu.memory_space<vmem>>, vector<16x128xf32>
    tpu.vector_store %arg12[%c0_29, %c0_30], %49 {strides = array<i32>} : memref<16x128xf32, #tpu.memory_space<vmem>>, vector<16x128xf32>,
    %c0_i32_31 = arith.constant 0 : i32
    %51 = arith.cmpi eq, %arg1, %c0_i32_31 : i32
    %52 = arith.extui %51 : i1 to i32
    %c0_i32_32 = arith.constant 0 : i32
    %53 = arith.cmpi ne, %52, %c0_i32_32 : i32
    scf.if %53 {
      %c0_33 = arith.constant 0 : index
      %c0_34 = arith.constant 0 : index
      %54 = vector.load %arg10[%c0_33, %c0_34] : memref<16x128xf32, #tpu.memory_space<vmem>>, vector<16x128xf32>
      %cst_35 = arith.constant dense<0.000000e+00> : vector<16xf32>
      %55 = vector.multi_reduction <add>, %54, %cst_35 [1] : vector<16x128xf32> to vector<16xf32>
      %56 = vector.shape_cast %55 : vector<16xf32> to vector<16x1xf32>
      %cst_36 = arith.constant -0.00544799166 : f32
      %57 = vector.broadcast %cst_36 : f32 to vector<16x1xf32>
      %58 = arith.addf %56, %57 : vector<16x1xf32>
      %59 = math.log %58 : vector<16x1xf32>
      %c0_37 = arith.constant 0 : index
      %c0_38 = arith.constant 0 : index
      %60 = vector.load %arg11[%c0_37, %c0_38] : memref<16x128xf32, #tpu.memory_space<vmem>>, vector<16x128xf32>
      %cst_39 = arith.constant dense<0.000000e+00> : vector<16xf32>
      %61 = vector.multi_reduction <add>, %60, %cst_39 [1] : vector<16x128xf32> to vector<16xf32>
      %62 = vector.shape_cast %61 : vector<16xf32> to vector<16x1xf32>
      %c0_40 = arith.constant 0 : index
      %c0_41 = arith.constant 0 : index
      %63 = vector.load %arg12[%c0_40, %c0_41] : memref<16x128xf32, #tpu.memory_space<vmem>>, vector<16x128xf32>
      %cst_42 = arith.constant dense<0.000000e+00> : vector<16xf32>
      %64 = vector.multi_reduction <add>, %63, %cst_42 [1] : vector<16x128xf32> to vector<16xf32>
      %65 = vector.shape_cast %64 : vector<16xf32> to vector<16x1xf32>
      %66 = arith.mulf %65, %59 : vector<16x1xf32>
      %67 = arith.subf %62, %66 : vector<16x1xf32>
      %68 = vector.shape_cast %67 : vector<16x1xf32> to vector<1x16x1xf32>
      %cst_43 = arith.constant dense<0.000000e+00> : vector<1xf32>
      %69 = vector.multi_reduction <add>, %68, %cst_43 [1, 2] : vector<1x16x1xf32> to vector<1xf32>
      %70 = vector.shape_cast %69 : vector<1xf32> to vector<1x1x1xf32>
      %71 = vector.extract %70[0, 0, 0] : f32 from vector<1x1x1xf32>
      %72 = vector.shape_cast %65 : vector<16x1xf32> to vector<1x16x1xf32>
      %cst_44 = arith.constant dense<0.000000e+00> : vector<1xf32>
      %73 = vector.multi_reduction <add>, %72, %cst_44 [1, 2] : vector<1x16x1xf32> to vector<1xf32>
      %74 = vector.shape_cast %73 : vector<1xf32> to vector<1x1x1xf32>
      %75 = vector.extract %74[0, 0, 0] : f32 from vector<1x1x1xf32>
      %76 = vector.broadcast %71 : f32 to vector<8x128xf32>
      %c0_45 = arith.constant 0 : index
      %c0_46 = arith.constant 0 : index
      %77 = vector.load %arg8[%c0_45, %c0_46] : memref<8x128xf32, #tpu.memory_space<vmem>>, vector<8x128xf32>
      tpu.vector_store %arg8[%c0_45, %c0_46], %76 {strides = array<i32>} : memref<8x128xf32, #tpu.memory_space<vmem>>, vector<8x128xf32>,
      %78 = vector.broadcast %75 : f32 to vector<8x128xf32>
      %c0_47 = arith.constant 0 : index
      %c0_48 = arith.constant 0 : index
      %79 = vector.load %arg9[%c0_47, %c0_48] : memref<8x128xf32, #tpu.memory_space<vmem>>, vector<8x128xf32>
      tpu.vector_store %arg9[%c0_47, %c0_48], %78 {strides = array<i32>} : memref<8x128xf32, #tpu.memory_space<vmem>>, vector<8x128xf32>,
    } else {
    }
    return
  }
  func.func @transform_0(%arg0: i32, %arg1: i32) -> (i32, i32) {
    %c0_i32 = arith.constant 0 : i32
    %c0_i32_0 = arith.constant 0 : i32
    return %arg0, %c0_i32 : i32, i32
  }
  func.func @transform_1(%arg0: i32, %arg1: i32) -> (i32, i32) {
    %c0_i32 = arith.constant 0 : i32
    %c0_i32_0 = arith.constant 0 : i32
    return %arg0, %c0_i32 : i32, i32
  }
  func.func @transform_2(%arg0: i32, %arg1: i32) -> (i32, i32) {
    %c0_i32 = arith.constant 0 : i32
    %c0_i32_0 = arith.constant 0 : i32
    return %c0_i32, %arg1 : i32, i32
  }
  func.func @transform_3(%arg0: i32, %arg1: i32) -> (i32, i32) {
    %c0_i32 = arith.constant 0 : i32
    %c0_i32_0 = arith.constant 0 : i32
    return %c0_i32, %arg1 : i32, i32
  }
  func.func @transform_4(%arg0: i32, %arg1: i32) -> (i32, i32) {
    %c0_i32 = arith.constant 0 : i32
    %c0_i32_0 = arith.constant 0 : i32
    return %arg0, %c0_i32 : i32, i32
  }
  func.func @transform_5(%arg0: i32, %arg1: i32) -> (i32, i32) {
    %c0_i32 = arith.constant 0 : i32
    %c0_i32_0 = arith.constant 0 : i32
    return %c0_i32, %arg1 : i32, i32
  }
  func.func @transform_6(%arg0: i32, %arg1: i32) -> (i32, i32) {
    %c0_i32 = arith.constant 0 : i32
    %c0_i32_0 = arith.constant 0 : i32
    return %arg0, %c0_i32 : i32, i32
  }
  func.func @transform_7(%arg0: i32, %arg1: i32) -> (i32, i32) {
    %c0_i32 = arith.constant 0 : i32
    %c0_i32_0 = arith.constant 0 : i32
    return %arg0, %c0_i32 : i32, i32
  }
}

</mosaic_0001>

<llo_original>
// kernel: tpu_custom_call.1
$region0: #{tpu_custom_call.1}
  #allocation0 [shape = 'u32[]', space=smem, size = 0x4, offset = 0x4, fixed_abs, tag = 'smem constant byte address 0x4 - core index']
  #allocation1 [shape = 'u32[144,128]{1,0:T(1,128)}', space=vmem, size = 0x12000, scoped, tag = 'internal scratch']
  #allocation2 [shape = 'f32[16,128]{1,0:T(8,128)}', space=vmem, size = 0x2000, scoped, tag = 'scratch operand']
  #allocation3 [shape = 'f32[16,128]{1,0:T(8,128)}', space=vmem, size = 0x2000, scoped, tag = 'scratch operand']
  #allocation4 [shape = 'f32[16,128]{1,0:T(8,128)}', space=vmem, size = 0x2000, scoped, tag = 'scratch operand']
  %s0 = inlined_call_operand.vmem [shape: bf16[16,128], index: 0, kind: input, shape index: {}]
  %s1 = inlined_call_operand.vmem [shape: bf16[16,128], index: 1, kind: input, shape index: {}]
  %s2 = inlined_call_operand.hbm [shape: bf16[128,128], index: 2, kind: input, shape index: {}]
  %s3 = inlined_call_operand.hbm [shape: bf16[128,128], index: 3, kind: input, shape index: {}]
  %s4 = inlined_call_operand.vmem [shape: s32[16,1], index: 4, kind: input, shape index: {}]
  %s5 = inlined_call_operand.vmem [shape: s32[1,128], index: 5, kind: input, shape index: {}]
  %s6 = inlined_call_operand.hbm [shape: f32[8,128], index: 6, kind: output, shape index: {0}]
  %s7 = inlined_call_operand.hbm [shape: f32[8,128], index: 7, kind: output, shape index: {1}]
  %8 = xla_tuple %s6, %s7
  %s9 = sld [smem:[#allocation0]]
  $region58: #{tpu_custom_call.1} parent=0
    _
  %s11 = ssub.s32 1, %s9
  %s12 = scalar_select 0, %s11, %s9
  $region1: #{tpu_custom_call.1} parent=0
    #allocation5 [shape = 'u8[32768]{0}', space=vmem, size = 0x8000, scoped, tag = 'input window, operand 2, single buffered']
    #allocation6 [shape = 's32[1]{0}', space=sflag, size = 0x4, scoped, tag = 'scoped memory for tpu_custom_call.1']
    #allocation7 [shape = 's32[1]{0}', space=sflag, size = 0x4, scoped, tag = 'scoped memory for tpu_custom_call.1']
    #allocation8 [shape = 'u8[32768]{0}', space=vmem, size = 0x8000, scoped, tag = 'input window, operand 3, single buffered']
    #allocation9 [shape = 's32[1]{0}', space=sflag, size = 0x4, scoped, tag = 'scoped memory for tpu_custom_call.1']
    #allocation10 [shape = 'u8[4096]{0}', space=vmem, size = 0x1000, scoped, tag = 'output window, operand 0, single buffered']
    #allocation11 [shape = 'u8[4096]{0}', space=vmem, size = 0x1000, scoped, tag = 'output window, operand 1, single buffered']
    #allocation12 [shape = 's32[1]{0}', space=sflag, size = 0x4, scoped, tag = 'scoped memory for tpu_custom_call.1']
    %13 = vsyncpa [#allocation6], 0
    %14 = vsyncpa [#allocation9], 0
    %15 = vsyncpa [#allocation7], 0
    %16 = vsyncpa [#allocation12], 0
    // Predicated region
    $region2: #{tpu_custom_call.1} parent=1 // pred_check
      _
    $region3: #{tpu_custom_call.1} parent=1 // pred_check_branch
      %18 = sbr.rel (0) target = $region5
    $region4: #{tpu_custom_call.1} parent=1 // pred_region
      _
    $region5: #{tpu_custom_call.1} parent=1 // pred_fallthru
      _
    // Predicated region
    $region6: #{tpu_custom_call.1} parent=1 // pred_check
      _
    $region7: #{tpu_custom_call.1} parent=1 // pred_check_branch
      %20 = sbr.rel (0) target = $region9
    $region8: #{tpu_custom_call.1} parent=1 // pred_region
      _
    $region9: #{tpu_custom_call.1} parent=1 // pred_fallthru
      _
    // Predicated region
    $region10: #{tpu_custom_call.1} parent=1 // pred_check
      _
    $region11: #{tpu_custom_call.1} parent=1 // pred_check_branch
      %22 = sbr.rel (0) target = $region13
    $region12: #{tpu_custom_call.1} parent=1 // pred_region
      %s24 = ssub.s32 1024, 1024
      %25 = vsyncadd [#allocation6], %s24
      %s26 = sshll.u32 [#allocation5], 4
      %s27 = int_to_ptr.vmem [resolvable:$true] %s26
      %32 = dma.hbm_to_vmem [thread:$0]  %s2, 1024, %s27, [#allocation6], 64, 64, 4
    $region13: #{tpu_custom_call.1} parent=1 // pred_fallthru
      _
    // Predicated region
    $region14: #{tpu_custom_call.1} parent=1 // pred_check
      _
    $region15: #{tpu_custom_call.1} parent=1 // pred_check_branch
      %34 = sbr.rel (0) target = $region17
    $region16: #{tpu_custom_call.1} parent=1 // pred_region
      %s36 = ssub.s32 1024, 1024
      %37 = vsyncadd [#allocation9], %s36
      %s38 = sshll.u32 [#allocation8], 4
      %s39 = int_to_ptr.vmem [resolvable:$true] %s38
      %44 = dma.hbm_to_vmem [thread:$0]  %s3, 1024, %s39, [#allocation9], 64, 64, 4
    $region17: #{tpu_custom_call.1} parent=1 // pred_fallthru
      _
    // Predicated region
    $region18: #{tpu_custom_call.1} parent=1 // pred_check
      _
    $region19: #{tpu_custom_call.1} parent=1 // pred_check_branch
      %46 = sbr.rel (0) target = $region21
    $region20: #{tpu_custom_call.1} parent=1 // pred_region
      _
    $region21: #{tpu_custom_call.1} parent=1 // pred_fallthru
      _
    // Predicated region
    $region22: #{tpu_custom_call.1} parent=1 // pred_check
      _
    $region23: #{tpu_custom_call.1} parent=1 // pred_check_branch
      %48 = sbr.rel (0) target = $region25
    $region24: #{tpu_custom_call.1} parent=1 // pred_region
      _
    $region25: #{tpu_custom_call.1} parent=1 // pred_fallthru
      _
    // Predicated region
    $region26: #{tpu_custom_call.1} parent=1 // pred_check
      _
    $region27: #{tpu_custom_call.1} parent=1 // pred_check_branch
      %50 = sbr.rel (0) target = $region29
    $region28: #{tpu_custom_call.1} parent=1 // pred_region
      %51 = dma.done [#allocation6], 1024
    $region29: #{tpu_custom_call.1} parent=1 // pred_fallthru
      _
    // Predicated region
    $region30: #{tpu_custom_call.1} parent=1 // pred_check
      _
    $region31: #{tpu_custom_call.1} parent=1 // pred_check_branch
      %53 = sbr.rel (0) target = $region33
    $region32: #{tpu_custom_call.1} parent=1 // pred_region
      %54 = dma.done [#allocation9], 1024
    $region33: #{tpu_custom_call.1} parent=1 // pred_fallthru
      _
    %p56 = scmp.eq.s32.totalorder 0, 0
    // Predicated region
    $region34: #{tpu_custom_call.1} parent=1 // pred_check
      %p57 = pneg %p56
    $region35: #{tpu_custom_call.1} parent=1 // pred_check_branch
      %59 = sbr.rel (%p57) target = $region37
    $region36: #{tpu_custom_call.1} parent=1 // pred_region
      %60 = vst [vmem:[#allocation2] sm:$0xff] 0.0
      %61 = vst [vmem:[#allocation2 + $0x8] sm:$0xff] 0.0
      %62 = vst [vmem:[#allocation3] sm:$0xff] 0.0
      %63 = vst [vmem:[#allocation3 + $0x8] sm:$0xff] 0.0
      %64 = vst [vmem:[#allocation4] sm:$0xff] 0.0
      %65 = vst [vmem:[#allocation4 + $0x8] sm:$0xff] 0.0
    $region37: #{tpu_custom_call.1} parent=1 // pred_fallthru
      _
    %v66 = vld [vmem:[%s0] sm:$0xf]
    %v67 = vld [vmem:[%s0 + $0x4] sm:$0xf]
    %v68 = vld [vmem:[%s1] sm:$0xf]
    %v69 = vld [vmem:[%s1 + $0x4] sm:$0xf]
    %v70 = vld [vmem:[#allocation5] sm:$0xf]
    %v71 = vld [vmem:[#allocation5 + $0x4] sm:$0xf]
    %v72 = vld [vmem:[#allocation5 + $0x8] sm:$0xf]
    %v73 = vld [vmem:[#allocation5 + $0xc] sm:$0xf]
    %v74 = vld [vmem:[#allocation5 + $0x10] sm:$0xf]
    %v75 = vld [vmem:[#allocation5 + $0x14] sm:$0xf]
    %v76 = vld [vmem:[#allocation5 + $0x18] sm:$0xf]
    %v77 = vld [vmem:[#allocation5 + $0x1c] sm:$0xf]
    %v78 = vld [vmem:[#allocation5 + $0x20] sm:$0xf]
    %v79 = vld [vmem:[#allocation5 + $0x24] sm:$0xf]
    %v80 = vld [vmem:[#allocation5 + $0x28] sm:$0xf]
    %v81 = vld [vmem:[#allocation5 + $0x2c] sm:$0xf]
    %v82 = vld [vmem:[#allocation5 + $0x30] sm:$0xf]
    %v83 = vld [vmem:[#allocation5 + $0x34] sm:$0xf]
    %v84 = vld [vmem:[#allocation5 + $0x38] sm:$0xf]
    %v85 = vld [vmem:[#allocation5 + $0x3c] sm:$0xf]
    %v86 = vld [vmem:[#allocation8] sm:$0xf]
    %v87 = vld [vmem:[#allocation8 + $0x4] sm:$0xf]
    %v88 = vld [vmem:[#allocation8 + $0x8] sm:$0xf]
    %v89 = vld [vmem:[#allocation8 + $0xc] sm:$0xf]
    %v90 = vld [vmem:[#allocation8 + $0x10] sm:$0xf]
    %v91 = vld [vmem:[#allocation8 + $0x14] sm:$0xf]
    %v92 = vld [vmem:[#allocation8 + $0x18] sm:$0xf]
    %v93 = vld [vmem:[#allocation8 + $0x1c] sm:$0xf]
    %v94 = vld [vmem:[#allocation8 + $0x20] sm:$0xf]
    %v95 = vld [vmem:[#allocation8 + $0x24] sm:$0xf]
    %v96 = vld [vmem:[#allocation8 + $0x28] sm:$0xf]
    %v97 = vld [vmem:[#allocation8 + $0x2c] sm:$0xf]
    %v98 = vld [vmem:[#allocation8 + $0x30] sm:$0xf]
    %v99 = vld [vmem:[#allocation8 + $0x34] sm:$0xf]
    %v100 = vld [vmem:[#allocation8 + $0x38] sm:$0xf]
    %v101 = vld [vmem:[#allocation8 + $0x3c] sm:$0xf]
    %v104 = vunpack.c.l.b16 %v66
    %v105 = vunpack.c.l.b16 %v67
    %v106 = vpack.c.b16 %v105, %v104
    %v124 = vunpack.c.l.b16 %v86
    %v125 = vunpack.c.l.b16 %v87
    %v126 = vunpack.c.l.b16 %v88
    %v127 = vunpack.c.l.b16 %v89
    %v128 = vunpack.c.l.b16 %v90
    %v129 = vunpack.c.l.b16 %v91
    %v130 = vunpack.c.l.b16 %v92
    %v131 = vunpack.c.l.b16 %v93
    %v132 = vunpack.c.l.b16 %v94
    %v133 = vunpack.c.l.b16 %v95
    %v134 = vunpack.c.l.b16 %v96
    %v135 = vunpack.c.l.b16 %v97
    %v136 = vunpack.c.l.b16 %v98
    %v137 = vunpack.c.l.b16 %v99
    %v138 = vunpack.c.l.b16 %v100
    %v139 = vunpack.c.l.b16 %v101
    %v140 = vpack.c.b16 %v125, %v124
    %v141 = vpack.c.b16 %v127, %v126
    %v142 = vpack.c.b16 %v129, %v128
    %v143 = vpack.c.b16 %v131, %v130
    %v144 = vpack.c.b16 %v133, %v132
    %v145 = vpack.c.b16 %v135, %v134
    %v146 = vpack.c.b16 %v137, %v136
    %v147 = vpack.c.b16 %v139, %v138
    %156 = vmatprep.subr.bf16.mxu0 0
    %157 = vmatpush1.bf16.msra.mxu0 %v140
    %158 = vmatprep.subr.bf16.mxu0 0
    %159 = vmatpush1.bf16.msra.mxu0 %v141
    %160 = vmatprep.subr.bf16.mxu0 0
    %161 = vmatpush1.bf16.msra.mxu0 %v142
    %162 = vmatprep.subr.bf16.mxu0 0
    %163 = vmatpush1.bf16.msra.mxu0 %v143
    %164 = vmatprep.subr.bf16.mxu0 0
    %165 = vmatpush1.bf16.msra.mxu0 %v144
    %166 = vmatprep.subr.bf16.mxu0 0
    %167 = vmatpush1.bf16.msra.mxu0 %v145
    %168 = vmatprep.subr.bf16.mxu0 0
    %169 = vmatpush1.bf16.msra.mxu0 %v146
    %170 = vmatprep.subr.bf16.mxu0 0
    %171 = vmatpush1.bf16.msra.mxu0 %v147
    %172 = vmatprep.subr.bf16.mxu0 0
    %173 = vmatpush1.bf16.msra.mxu0 0
    %174 = vmatprep.subr.bf16.mxu0 0
    %175 = vmatpush1.bf16.msra.mxu0 0
    %176 = vmatprep.subr.bf16.mxu0 0
    %177 = vmatpush1.bf16.msra.mxu0 0
    %178 = vmatprep.subr.bf16.mxu0 0
    %179 = vmatpush1.bf16.msra.mxu0 0
    %180 = vmatprep.subr.bf16.mxu0 0
    %181 = vmatpush1.bf16.msra.mxu0 0
    %182 = vmatprep.subr.bf16.mxu0 0
    %183 = vmatpush1.bf16.msra.mxu0 0
    %184 = vmatprep.subr.bf16.mxu0 0
    %185 = vmatpush1.bf16.msra.mxu0 0
    %186 = vmatprep.subr.bf16.mxu0 0
    %187 = vmatpush1.bf16.msra.mxu0 0
    %188 = vmatprep.mubr.bf16.mxu0 0
    %189 = vmatmul.mubr.bf16.gmra.mrb[0].mxu0 %v106
    %v190 = vpop.f32.mrb[0].mxu0
    %v191 = vadd.f32 0.0, %v190
    %v192 = vpop.f32.mrb[0].mxu0
    %v193 = vpop.f32.mrb[0].mxu0
    %v194 = vadd.f32 0.0, %v193
    %v195 = vpop.f32.mrb[0].mxu0
    %196 = vdwg.mxu0
    %v213 = vunpack.c.l.b16 %v70
    %v214 = vunpack.c.l.b16 %v71
    %v215 = vunpack.c.l.b16 %v72
    %v216 = vunpack.c.l.b16 %v73
    %v217 = vunpack.c.l.b16 %v74
    %v218 = vunpack.c.l.b16 %v75
    %v219 = vunpack.c.l.b16 %v76
    %v220 = vunpack.c.l.b16 %v77
    %v221 = vunpack.c.l.b16 %v78
    %v222 = vunpack.c.l.b16 %v79
    %v223 = vunpack.c.l.b16 %v80
    %v224 = vunpack.c.l.b16 %v81
    %v225 = vunpack.c.l.b16 %v82
    %v226 = vunpack.c.l.b16 %v83
    %v227 = vunpack.c.l.b16 %v84
    %v228 = vunpack.c.l.b16 %v85
    %v229 = vpack.c.b16 %v214, %v213
    %v230 = vpack.c.b16 %v216, %v215
    %v231 = vpack.c.b16 %v218, %v217
    %v232 = vpack.c.b16 %v220, %v219
    %v233 = vpack.c.b16 %v222, %v221
    %v234 = vpack.c.b16 %v224, %v223
    %v235 = vpack.c.b16 %v226, %v225
    %v236 = vpack.c.b16 %v228, %v227
    %245 = vmatprep.subr.bf16.mxu0 0
    %246 = vmatpush1.bf16.msra.mxu0 %v229
    %247 = vmatprep.subr.bf16.mxu0 0
    %248 = vmatpush1.bf16.msra.mxu0 %v230
    %249 = vmatprep.subr.bf16.mxu0 0
    %250 = vmatpush1.bf16.msra.mxu0 %v231
    %251 = vmatprep.subr.bf16.mxu0 0
    %252 = vmatpush1.bf16.msra.mxu0 %v232
    %253 = vmatprep.subr.bf16.mxu0 0
    %254 = vmatpush1.bf16.msra.mxu0 %v233
    %255 = vmatprep.subr.bf16.mxu0 0
    %256 = vmatpush1.bf16.msra.mxu0 %v234
    %257 = vmatprep.subr.bf16.mxu0 0
    %258 = vmatpush1.bf16.msra.mxu0 %v235
    %259 = vmatprep.subr.bf16.mxu0 0
    %260 = vmatpush1.bf16.msra.mxu0 %v236
    %261 = vmatprep.subr.bf16.mxu0 0
    %262 = vmatpush1.bf16.msra.mxu0 0
    %263 = vmatprep.subr.bf16.mxu0 0
    %264 = vmatpush1.bf16.msra.mxu0 0
    %265 = vmatprep.subr.bf16.mxu0 0
    %266 = vmatpush1.bf16.msra.mxu0 0
    %267 = vmatprep.subr.bf16.mxu0 0
    %268 = vmatpush1.bf16.msra.mxu0 0
    %269 = vmatprep.subr.bf16.mxu0 0
    %270 = vmatpush1.bf16.msra.mxu0 0
    %271 = vmatprep.subr.bf16.mxu0 0
    %272 = vmatpush1.bf16.msra.mxu0 0
    %273 = vmatprep.subr.bf16.mxu0 0
    %274 = vmatpush1.bf16.msra.mxu0 0
    %275 = vmatprep.subr.bf16.mxu0 0
    %276 = vmatpush1.bf16.msra.mxu0 0
    %277 = vmatprep.mubr.bf16.mxu0 0
    %278 = vmatmul.mubr.bf16.gmra.mrb[0].mxu0 %v106
    %v279 = vpop.f32.mrb[0].mxu0
    %v280 = vadd.f32 %v191, %v279
    %v281 = vpop.f32.mrb[0].mxu0
    %v282 = vpop.f32.mrb[0].mxu0
    %v283 = vadd.f32 %v194, %v282
    %v284 = vpop.f32.mrb[0].mxu0
    %285 = vdwg.mxu0
    %v288 = vunpack.c.l.b16 %v68
    %v289 = vunpack.c.l.b16 %v69
    %v290 = vpack.c.b16 %v289, %v288
    %292 = vmatprep.subr.bf16.mxu0 0
    %293 = vmatpush1.bf16.msra.mxu0 %v229
    %294 = vmatprep.subr.bf16.mxu0 0
    %295 = vmatpush1.bf16.msra.mxu0 %v230
    %296 = vmatprep.subr.bf16.mxu0 0
    %297 = vmatpush1.bf16.msra.mxu0 %v231
    %298 = vmatprep.subr.bf16.mxu0 0
    %299 = vmatpush1.bf16.msra.mxu0 %v232
    %300 = vmatprep.subr.bf16.mxu0 0
    %301 = vmatpush1.bf16.msra.mxu0 %v233
    %302 = vmatprep.subr.bf16.mxu0 0
    %303 = vmatpush1.bf16.msra.mxu0 %v234
    %304 = vmatprep.subr.bf16.mxu0 0
    %305 = vmatpush1.bf16.msra.mxu0 %v235
    %306 = vmatprep.subr.bf16.mxu0 0
    %307 = vmatpush1.bf16.msra.mxu0 %v236
    %308 = vmatprep.subr.bf16.mxu0 0
    %309 = vmatpush1.bf16.msra.mxu0 0
    %310 = vmatprep.subr.bf16.mxu0 0
    %311 = vmatpush1.bf16.msra.mxu0 0
    %312 = vmatprep.subr.bf16.mxu0 0
    %313 = vmatpush1.bf16.msra.mxu0 0
    %314 = vmatprep.subr.bf16.mxu0 0
    %315 = vmatpush1.bf16.msra.mxu0 0
    %316 = vmatprep.subr.bf16.mxu0 0
    %317 = vmatpush1.bf16.msra.mxu0 0
    %318 = vmatprep.subr.bf16.mxu0 0
    %319 = vmatpush1.bf16.msra.mxu0 0
    %320 = vmatprep.subr.bf16.mxu0 0
    %321 = vmatpush1.bf16.msra.mxu0 0
    %322 = vmatprep.subr.bf16.mxu0 0
    %323 = vmatpush1.bf16.msra.mxu0 0
    %324 = vmatprep.mubr.bf16.mxu0 0
    %325 = vmatmul.mubr.bf16.gmra.mrb[0].mxu0 %v290
    %v326 = vpop.f32.mrb[0].mxu0
    %v327 = vadd.f32 0.0, %v326
    %v328 = vpop.f32.mrb[0].mxu0
    %v329 = vpop.f32.mrb[0].mxu0
    %v330 = vadd.f32 0.0, %v329
    %v331 = vpop.f32.mrb[0].mxu0
    %332 = vdwg.mxu0
    %v333 = vadd.f32 %v280, %v327
    %v334 = vadd.f32 %v283, %v330
    %v335 = vld [vmem:[%s4] sm:$0xff]
    %v336 = vld [vmem:[%s4 + $0x8] sm:$0xff]
    %s337 = smul.u32 0, 16
    %v338 = vlaneseq
    %v339 = vshrl.u32 %v338, 7
    %v340 = vadd.s32 %v339, 8
    %v341 = vstv %s337
    %v342 = vadd.s32 %v341, %v339
    %v343 = vadd.s32 %v341, %v340
    %v344 = vld [vmem:[%s5] sm:$0x1]
    %s345 = smul.u32 0, 128
    %v346 = vlaneseq
    %v347 = vand.u32 %v346, 127
    %v348 = vstv %s345
    %v349 = vadd.s32 %v348, %v347
    %350 = vset.pattern.permute.xlu0 0
    %351 = vperm.xlu0 %350, %v335
    %v352 = vpop.permute.xlu0 %351
    %353 = vset.pattern.permute.xlu0 0
    %354 = vperm.xlu0 %353, %v336
    %v355 = vpop.permute.xlu0 %354
    %v356 = vlaneseq
    %v357 = vshrl.u32 %v356, 7
    %v358 = vsub.s32 0, %v357
    %v359 = vrot.slane %v344, %v358
    %vm360 = vcmp.eq.s32.totalorder %v352, %v359
    %vm361 = vcmp.eq.s32.totalorder %v355, %v359
    %vm362 = vcmp.ne.s32.totalorder %v342, %v349
    %vm363 = vcmp.ne.s32.totalorder %v343, %v349
    %vm364 = vmand %vm360, %vm362
    %vm365 = vmand %vm361, %vm363
    %v366 = vmul.f32 %v333, 10.0
    %v367 = vmul.f32 %v334, 10.0
    %v368 = vsub.f32 %v366, 10.0
    %v369 = vsub.f32 %v367, 10.0
    %v370 = vmul.f32 %v368, 1.442695
    %v371 = vpow.pop %v370
    %v372 = vmul.f32 %v369, 1.442695
    %v373 = vpow.pop %v372
    %v374 = vadd.f32 %v371, 4.539993e-11
    %v375 = vadd.f32 %v373, 4.539993e-11
    %v376 = vlog2.pop %v374
    %v377 = vmul.f32 %v376, 0.6931472
    %v378 = vlog2.pop %v375
    %v379 = vmul.f32 %v378, 0.6931472
    %v380 = vsel %vm364, %v377, 0.0
    %v381 = vsel %vm365, %v379, 0.0
    %v382 = vld [vmem:[#allocation2] sm:$0xff]
    %v383 = vld [vmem:[#allocation2 + $0x8] sm:$0xff]
    %v384 = vadd.f32 %v382, %v371
    %v385 = vadd.f32 %v383, %v373
    %386 = vst [vmem:[#allocation2] sm:$0xff] %v384
    %387 = vst [vmem:[#allocation2 + $0x8] sm:$0xff] %v385
    %v388 = vld [vmem:[#allocation3] sm:$0xff]
    %v389 = vld [vmem:[#allocation3 + $0x8] sm:$0xff]
    %v390 = vadd.f32 %v388, %v380
    %v391 = vadd.f32 %v389, %v381
    %392 = vst [vmem:[#allocation3] sm:$0xff] %v390
    %393 = vst [vmem:[#allocation3 + $0x8] sm:$0xff] %v391
    %v394 = vld [vmem:[#allocation4] sm:$0xff]
    %v395 = vld [vmem:[#allocation4 + $0x8] sm:$0xff]
    %v396 = vsel %vm364, 1, 0
    %v397 = vsel %vm365, 1, 0
    %v398 = vcvt.s32.f32 %v396
    %v399 = vcvt.s32.f32 %v397
    %v400 = vadd.f32 %v394, %v398
    %v401 = vadd.f32 %v395, %v399
    %402 = vst [vmem:[#allocation4] sm:$0xff] %v400
    %403 = vst [vmem:[#allocation4 + $0x8] sm:$0xff] %v401
    // Predicated region
    $region38: #{tpu_custom_call.1} parent=1 // pred_check
      %p404 = pneg %p56
    $region39: #{tpu_custom_call.1} parent=1 // pred_check_branch
      %406 = sbr.rel (%p404) target = $region41
    $region40: #{tpu_custom_call.1} parent=1 // pred_region
      %v407 = vld [vmem:[#allocation2] sm:$0xff]
      %v408 = vld [vmem:[#allocation2 + $0x8] sm:$0xff]
      %409 = vadd.xlane.f32.xlu0 %v407
      %v410 = vpop.xlane.xlu0 %409
      %411 = vadd.xlane.f32.xlu0 %v408
      %v412 = vpop.xlane.xlu0 %411
      %v413 = vadd.f32 %v410, -0.0054479917
      %v414 = vadd.f32 %v412, -0.0054479917
      %v415 = vlog2.pop %v413
      %v416 = vmul.f32 %v415, 0.6931472
      %v417 = vlog2.pop %v414
      %v418 = vmul.f32 %v417, 0.6931472
      %v419 = vld [vmem:[#allocation3] sm:$0xff]
      %v420 = vld [vmem:[#allocation3 + $0x8] sm:$0xff]
      %421 = vadd.xlane.f32.xlu0 %v419
      %v422 = vpop.xlane.xlu0 %421
      %423 = vadd.xlane.f32.xlu0 %v420
      %v424 = vpop.xlane.xlu0 %423
      %v425 = vld [vmem:[#allocation4] sm:$0xff]
      %v426 = vld [vmem:[#allocation4 + $0x8] sm:$0xff]
      %427 = vadd.xlane.f32.xlu0 %v425
      %v428 = vpop.xlane.xlu0 %427
      %429 = vadd.xlane.f32.xlu0 %v426
      %v430 = vpop.xlane.xlu0 %429
      %v431 = vmul.f32 %v428, %v416
      %v432 = vmul.f32 %v430, %v418
      %v433 = vsub.f32 %v422, %v431
      %v434 = vsub.f32 %v424, %v432
      %vm435 = vcmask 7168
      %v436 = vsel %vm435, %v433, 0.0
      %v437 = vsel %vm435, %v434, 0.0
      %v438 = vadd.f32 %v436, %v437
      %439 = vadd.xlane.f32.xlu0 %v438
      %v440 = vpop.xlane.xlu0 %439
      %v441 = vrot.slane %v440, 4
      %v442 = vadd.f32 %v440, %v441
      %v443 = vrot.slane %v442, 2
      %v444 = vadd.f32 %v442, %v443
      %v445 = vrot.slane %v444, 1
      %v446 = vadd.f32 %v444, %v445
      %s447 = vtos %v446
      %v448 = vsel %vm435, %v428, 0.0
      %v449 = vsel %vm435, %v430, 0.0
      %v450 = vadd.f32 %v448, %v449
      %451 = vadd.xlane.f32.xlu0 %v450
      %v452 = vpop.xlane.xlu0 %451
      %v453 = vrot.slane %v452, 4
      %v454 = vadd.f32 %v452, %v453
      %v455 = vrot.slane %v454, 2
      %v456 = vadd.f32 %v454, %v455
      %v457 = vrot.slane %v456, 1
      %v458 = vadd.f32 %v456, %v457
      %s459 = vtos %v458
      %v460 = vstv %s447
      %461 = vst [vmem:[#allocation10] sm:$0xff] %v460
      %v462 = vstv %s459
      %463 = vst [vmem:[#allocation11] sm:$0xff] %v462
    $region41: #{tpu_custom_call.1} parent=1 // pred_fallthru
      _
    // Predicated region
    $region42: #{tpu_custom_call.1} parent=1 // pred_check
      _
    $region43: #{tpu_custom_call.1} parent=1 // pred_check_branch
      %465 = sbr.rel (0) target = $region45
    $region44: #{tpu_custom_call.1} parent=1 // pred_region
      %s467 = ssub.s32 128, 128
      %468 = vsyncadd [#allocation7], %s467
      %s470 = sshll.u32 [#allocation10], 4
      %s471 = int_to_ptr.vmem [resolvable:$true] %s470
      %473 = dma.vmem_to_hbm [thread:$0]  %s471, 128, %s6, [#allocation7]
    $region45: #{tpu_custom_call.1} parent=1 // pred_fallthru
      _
    // Predicated region
    $region46: #{tpu_custom_call.1} parent=1 // pred_check
      _
    $region47: #{tpu_custom_call.1} parent=1 // pred_check_branch
      %475 = sbr.rel (0) target = $region49
    $region48: #{tpu_custom_call.1} parent=1 // pred_region
      %s477 = ssub.s32 128, 128
      %478 = vsyncadd [#allocation12], %s477
      %s480 = sshll.u32 [#allocation11], 4
      %s481 = int_to_ptr.vmem [resolvable:$true] %s480
      %483 = dma.vmem_to_hbm [thread:$0]  %s481, 128, %s7, [#allocation12]
    $region49: #{tpu_custom_call.1} parent=1 // pred_fallthru
      _
    // Predicated region
    $region50: #{tpu_custom_call.1} parent=1 // pred_check
      _
    $region51: #{tpu_custom_call.1} parent=1 // pred_check_branch
      %485 = sbr.rel (0) target = $region53
    $region52: #{tpu_custom_call.1} parent=1 // pred_region
      %486 = dma.done [#allocation7], 128
    $region53: #{tpu_custom_call.1} parent=1 // pred_fallthru
      _
    // Predicated region
    $region54: #{tpu_custom_call.1} parent=1 // pred_check
      _
    $region55: #{tpu_custom_call.1} parent=1 // pred_check_branch
      %488 = sbr.rel (0) target = $region57
    $region56: #{tpu_custom_call.1} parent=1 // pred_region
      %489 = dma.done [#allocation12], 128
    $region57: #{tpu_custom_call.1} parent=1 // pred_fallthru
      _
    %490 = vsyncpa [#allocation6], 1
    %491 = vsyncpa [#allocation9], 1
    %492 = vsyncpa [#allocation7], 1
    %493 = vsyncpa [#allocation12], 1

</llo_original>
